<compile_context>
chip_gen: v6e
topology: v6e:2x2x1
jax: 0.10.0
libtpu: 0.0.40
codegen_flags: <defaults>
</compile_context>

<pallas_src>
import jax
import jax.numpy as jnp
from jax import lax
from jax.experimental import pallas as pl
from jax.experimental.pallas import tpu as pltpu


def _round_up(a, b):
    return ((a + b - 1) // b) * b


# --------------------------------------------------------------------------
# Pallas kernel: one (Noutp, Kp) x (Kp, thw) MXU tile per grid step.
# bf16 operands, f32 accumulation, bf16 lane-dense store.
# --------------------------------------------------------------------------
def _gemm_kernel(w_ref, x_ref, o_ref):
    o_ref[0] = jnp.dot(w_ref[...], x_ref[0],
                       preferred_element_type=jnp.float32).astype(o_ref.dtype)


def upsample_fc_layer(x, w, b, *, stride, padding, output_padding,
                      activation=None, lane_tile=512):
    """Forward pass of UpsampleFCLayer: act(ConvTranspose2d(x, w, b))."""
    N, CI, H, W = x.shape
    CI_w, CO, KH, KW = w.shape
    assert CI == CI_w
    s, p, op = stride, padding, output_padding
    OH = (H - 1) * s - 2 * p + KH + op
    OW = (W - 1) * s - 2 * p + KW + op
    assert OH > 0 and OW > 0

    HW = H * W
    Nout = CO * KH * KW
    Kp = _round_up(CI, 16)        # bf16 sublane packing only -- never 128
    Noutp = _round_up(Nout, 16)   # sublane dim of the GEMM output

    # Lane tile over the spatial axis (multiple of 128 => unmasked stores).
    thw = lane_tile
    if HW < thw:
        thw = _round_up(HW, 128)
    HWp = _round_up(HW, thw)
    # v7x: keep >= 2 grid steps so both TensorCores get work.
    if N * (HWp // thw) < 2 and thw % 256 == 0:
        thw //= 2                 # HWp stays a multiple of thw

    # x consumed in native NCHW layout: reshape + (tiny) pad + bf16 cast only.
    x_g = jnp.pad(x.reshape(N, CI, HW),
                  ((0, 0), (0, Kp - CI), (0, HWp - HW))).astype(jnp.bfloat16)
    # Wm[(co, kh, kw), ci] = w[ci, co, kh, kw]; tiny and VMEM-resident.
    w_g = jnp.pad(jnp.transpose(w, (1, 2, 3, 0)).reshape(Nout, CI),
                  ((0, Noutp - Nout), (0, Kp - CI))).astype(jnp.bfloat16)

    cost = pl.CostEstimate(
        flops=2 * N * Noutp * Kp * HWp,
        transcendentals=0,
        bytes_accessed=x_g.size * 2 + w_g.size * 2 + N * Noutp * HWp * 2)

    # Note: for production-sized CO*KH*KW (multi-MiB Noutp x thw blocks) add a
    # grid axis tiling Noutp so the double-buffered footprint stays inside
    # v7x's 64 MiB VMEM; unnecessary at these sizes.
    z = pl.pallas_call(
        _gemm_kernel,
        out_shape=jax.ShapeDtypeStruct((N, Noutp, HWp), jnp.bfloat16),
        grid_spec=pltpu.PrefetchScalarGridSpec(
            num_scalar_prefetch=0,
            grid=(N, HWp // thw),
            in_specs=[
                pl.BlockSpec((Noutp, Kp), lambda n, j: (0, 0)),      # resident W
                pl.BlockSpec((1, Kp, thw), lambda n, j: (n, 0, j)),  # x tile
            ],
            out_specs=pl.BlockSpec((1, Noutp, thw), lambda n, j: (n, 0, j)),
        ),
        compiler_params=pltpu.CompilerParams(
            dimension_semantics=("parallel", "parallel"),
            vmem_limit_bytes=32 * 1024 * 1024),
        cost_estimate=cost,
    )(w_g, x_g)

    # ---- col2im as an s*s phase decomposition + depth-to-space, with bias and
    #      activation fused into the dense per-phase sums (plain JAX; XLA fuses
    #      the elementwise tail -- the old bias/act kernel is gone).
    z = z[:, :Nout, :HW].reshape(N, CO, KH, KW, H, W)
    EH = max((H - 1) * s + KH, p + OH)
    EW = max((W - 1) * s + KW, p + OW)
    EHd = -(-EH // s)
    EWd = -(-EW // s)
    bias = b.astype(jnp.float32).reshape(1, CO, 1, 1)

    phase_rows = []
    for ph in range(s):
        row = []
        for pw in range(s):
            terms = []
            for kh in range(ph, KH, s):
                qh = (kh - ph) // s
                for kw in range(pw, KW, s):
                    qw = (kw - pw) // s
                    slab = z[:, :, kh, kw, :, :].astype(jnp.float32)
                    terms.append(jnp.pad(
                        slab, ((0, 0), (0, 0),
                               (qh, EHd - H - qh), (qw, EWd - W - qw))))
            acc = sum(terms) if terms else jnp.zeros(
                (N, CO, EHd, EWd), jnp.float32)
            acc = acc + bias
            if activation == "relu":
                acc = jnp.maximum(acc, 0.0)
            elif activation == "sigmoid":
                acc = jax.nn.sigmoid(acc)
            # activation is None -> identity
            row.append(acc.astype(x.dtype))
        phase_rows.append(jnp.stack(row, axis=-1))       # (N,CO,EHd,EWd,s_w)
    y = jnp.stack(phase_rows, axis=-2)                   # (N,CO,EHd,EWd,s_h,s_w)
    y = jnp.transpose(y, (0, 1, 2, 4, 3, 5)).reshape(N, CO, EHd * s, EWd * s)
    return y[:, :, p:p + OH, p:p + OW]


def _reference(x, w, b, *, stride, padding, output_padding, activation):
    """Pure-JAX reference for ConvTranspose2d + activation (NCHW)."""
    KH, KW = w.shape[2], w.shape[3]
    kernel = jnp.transpose(w[:, :, ::-1, ::-1], (1, 0, 2, 3))  # (CO, CI, KH, KW)
    y = lax.conv_general_dilated(
        x, kernel, window_strides=(1, 1),
        padding=[(KH - 1 - padding, KH - 1 - padding + output_padding),
                 (KW - 1 - padding, KW - 1 - padding + output_padding)],
        lhs_dilation=(stride, stride),
        dimension_numbers=("NCHW", "OIHW", "NCHW"))
    y = y + b.reshape(1, -1, 1, 1)
    if activation == "relu":
        y = jnp.maximum(y, 0.0)
    elif activation == "sigmoid":
        y = jax.nn.sigmoid(y)
    return y


if __name__ == "__main__":
    # UpsampleFCLayer(in_channels=4, out_channels=8, filter_dim=3, stride=2,
    #                 padding=1, activation='relu'); module sets output_padding=padding.
    N, CI, H, W = 2, 4, 16, 16
    CO, KH, STRIDE, PAD = 8, 3, 2, 1
    OUT_PAD = PAD
    ACT = "relu"

    key = jax.random.PRNGKey(0)
    kx, kw, kb = jax.random.split(key, 3)
    x = jax.random.normal(kx, (N, CI, H, W), jnp.float32)
    w = jax.random.normal(kw, (CI, CO, KH, KH), jnp.float32) * 0.1
    b = jax.random.normal(kb, (CO,), jnp.float32) * 0.1

    y = upsample_fc_layer(x, w, b, stride=STRIDE, padding=PAD,
                          output_padding=OUT_PAD, activation=ACT)
    y = jax.block_until_ready(y)

    # The kernel feeds the MXU bf16 operands (f32 accumulation) and writes the
    # pre-col2im tensor back in bf16, so compare against a reference built from
    # the same bf16-rounded operands with a tolerance covering that one extra
    # bf16 rounding before the <=4 overlap-adds.
    x_r = x.astype(jnp.bfloat16).astype(jnp.float32)
    w_r = w.astype(jnp.bfloat16).astype(jnp.float32)
    y_ref = _reference(x_r, w_r, b, stride=STRIDE, padding=PAD,
                       output_padding=OUT_PAD, activation=ACT)

    OH = (H - 1) * STRIDE - 2 * PAD + KH + OUT_PAD
    assert y.shape == (N, CO, OH, OH), y.shape
    assert jnp.allclose(y, y_ref, rtol=2e-2, atol=2e-2), \
        float(jnp.max(jnp.abs(y - y_ref)))

    print("KERNEL_OK")
</pallas_src>

<mosaic_0001>
module attributes {stable_mosaic.version = 11 : i64} {
  func.func @_gemm_kernel(%arg0: i32, %arg1: i32, %arg2: memref<80x16xbf16, #tpu.memory_space<vmem>>, %arg3: memref<1x16x256xbf16, #tpu.memory_space<vmem>>, %arg4: memref<1x80x256xbf16, #tpu.memory_space<vmem>>) attributes {dimension_semantics = [#tpu.dimension_semantics<parallel>, #tpu.dimension_semantics<parallel>], iteration_bounds = array<i64: 2, 1>, scalar_prefetch = 0 : i64, scratch_operands = 0 : i64, tpu.core_type = #tpu.core_type<tc>, window_params = [{pipeline_mode = #tpu.pipeline_mode<synchronous>, transform_indices = @transform_0, window_bounds = array<i64: 80, 16>}, {transform_indices = @transform_1, window_bounds = array<i64: 1, 16, 256>}, {transform_indices = @transform_2, window_bounds = array<i64: 1, 80, 256>}]} {
    %c0 = arith.constant 0 : index
    %c0_0 = arith.constant 0 : index
    %0 = vector.load %arg2[%c0, %c0_0] : memref<80x16xbf16, #tpu.memory_space<vmem>>, vector<80x16xbf16>
    %c0_1 = arith.constant 0 : index
    %c0_2 = arith.constant 0 : index
    %c0_3 = arith.constant 0 : index
    %1 = vector.load %arg3[%c0_1, %c0_2, %c0_3] : memref<1x16x256xbf16, #tpu.memory_space<vmem>>, vector<1x16x256xbf16>
    %2 = vector.shape_cast %1 : vector<1x16x256xbf16> to vector<16x256xbf16>
    %cst = arith.constant dense<0.000000e+00> : vector<80x256xf32>
    %3 = tpu.matmul %0, %2, %cst {dimension_numbers = #tpu.dot_dimension_numbers<[1], [0], [0], [1], [0, 0, 1, 1], [], []>} : vector<80x16xbf16>, vector<16x256xbf16>, vector<80x256xf32> -> vector<80x256xf32>
    %4 = arith.truncf %3 : vector<80x256xf32> to vector<80x256xbf16>
    %c0_4 = arith.constant 0 : index
    %c0_5 = arith.constant 0 : index
    %c0_6 = arith.constant 0 : index
    %5 = vector.load %arg4[%c0_4, %c0_5, %c0_6] : memref<1x80x256xbf16, #tpu.memory_space<vmem>>, vector<1x80x256xbf16>
    %6 = vector.shape_cast %5 : vector<1x80x256xbf16> to vector<80x256xbf16>
    %7 = vector.shape_cast %4 : vector<80x256xbf16> to vector<1x80x256xbf16>
    tpu.vector_store %arg4[%c0_4, %c0_5, %c0_6], %7 {strides = array<i32>} : memref<1x80x256xbf16, #tpu.memory_space<vmem>>, vector<1x80x256xbf16>,
    return
  }
  func.func @transform_0(%arg0: i32, %arg1: i32) -> (i32, i32) {
    %c0_i32 = arith.constant 0 : i32
    %c0_i32_0 = arith.constant 0 : i32
    %c0_i32_1 = arith.constant 0 : i32
    return %c0_i32, %c0_i32_0 : i32, i32
  }
  func.func @transform_1(%arg0: i32, %arg1: i32) -> (i32, i32, i32) {
    %c0_i32 = arith.constant 0 : i32
    %c0_i32_0 = arith.constant 0 : i32
    return %arg0, %c0_i32, %arg1 : i32, i32, i32
  }
  func.func @transform_2(%arg0: i32, %arg1: i32) -> (i32, i32, i32) {
    %c0_i32 = arith.constant 0 : i32
    %c0_i32_0 = arith.constant 0 : i32
    return %arg0, %c0_i32, %arg1 : i32, i32, i32
  }
}

</mosaic_0001>

<llo_original>
// kernel: tpu_custom_call.1
$region0: #{tpu_custom_call.1}
  #allocation0 [shape = 'u32[]', space=smem, size = 0x4, offset = 0x4, fixed_abs, tag = 'smem constant byte address 0x4 - core index']
  #allocation1 [shape = 'u32[144,128]{1,0:T(1,128)}', space=vmem, size = 0x12000, scoped, tag = 'internal scratch']
  %s0 = inlined_call_operand.vmem [shape: bf16[80,16], index: 0, kind: input, shape index: {}]
  %s1 = inlined_call_operand.vmem [shape: bf16[2,16,256], index: 1, kind: input, shape index: {}]
  %s2 = inlined_call_operand.hbm [shape: bf16[2,80,256], index: 2, kind: output, shape index: {}]
  %s3 = sld [smem:[#allocation0]]
  $region41: #{tpu_custom_call.1} parent=0
    _
  %s5 = ssub.s32 1, %s3
  %s6 = scalar_select 0, %s5, %s3
  $region1: #{tpu_custom_call.1} parent=0
    #allocation2 [shape = 'u8[81920]{0}', space=vmem, size = 0x14000, scoped, tag = 'output window, operand 0']
    #allocation3 [shape = 's32[2]{0}', space=sflag, size = 0x8, scoped, tag = 'scoped memory for tpu_custom_call.1']
    %7 = vsyncpa [#allocation3], 0
    %s8 = scalar_lea.sflag [#allocation3], 1
    %9 = vsyncpa %s8, 0
    loop: start=0, step=1, limit=4
    $region2: #{tpu_custom_call.1} parent=1 // loop_pre_header
      _
    $region3: #{tpu_custom_call.1} parent=1 // loop_header
      %s11 = sphi 0, %s15
      %p12 = scmp.ge.s32.totalorder %s11, 4
      %s18 = sphi 0, %s30
      %s19 = sphi 0, %s26
      %s20 = sphi 0, %s18
      %s21 = sphi 0, %s19
      %s22 = sphi 0, %s20
      %s23 = sphi 0, %s21
      %s31 = sphi 0, %s31
      %s33 = sphi 0, %s31
      %s34 = sphi 0, %s33
      %s48 = sphi 0, %s34
      %s56 = sphi 0, %s58
      %s59 = sphi 0, %s56
      %s60 = sphi 0, %s59
      %s76 = sphi 0, %s60
      %s84 = sphi 0, %s86
      %s87 = sphi 0, %s84
      %s88 = sphi 0, %s87
      %s104 = sphi 0, %s88
    $region4: #{tpu_custom_call.1} parent=1 // loop_header_branch
      %14 = sbr.rel (%p12) target = $region8
    $region5: #{tpu_custom_call.1} parent=1 // loop_body
      %s16 = ssub.s32 %s11, 1
      %s17 = ssub.s32 %s11, 2
      %s24 = sadd.s32 1, %s19
      %p25 = scmp.ge.s32.totalorder %s24, 1
      %s26 = scalar_select %p25, 0, %s24
      %s27 = sadd.s32 1, %s18
      %s28 = scalar_select %p25, %s27, %s18
      %p29 = scmp.ge.s32.totalorder %s28, 2
      %s30 = scalar_select %p29, 0, %s28
      %s32 = sadd.s32 %s31, 1
      %p35 = scmp.eq.s32.totalorder %s11, 1
      %p36 = scmp.ne.s32.totalorder %s31, %s33
      %p37 = scmp.eq.s32.totalorder %s11, 0
      %p38 = por %p36, %p37
      %p39 = scmp.ne.s32.totalorder %s31, %s33
      %p40 = scmp.eq.s32.totalorder %s16, 1
      %p41 = por %p39, %p40
      %p42 = scmp.ne.s32.totalorder %s33, %s34
      %p43 = scmp.eq.s32.totalorder %s16, 0
      %p44 = por %p42, %p43
      %p45 = scmp.ne.s32.totalorder %s33, %s34
      %p46 = scmp.eq.s32.totalorder %s17, 1
      %p47 = por %p45, %p46
      %p49 = scmp.ne.s32.totalorder %s34, %s48
      %p50 = scmp.eq.s32.totalorder %s17, 0
      %p51 = por %p49, %p50
      %s52 = ssub.s32 %s18, %s30
      %s53 = ssub.s32 %s19, %s26
      %s54 = sor.u32 %s52, %s53
      %p55 = scmp.eq.s32.totalorder %s54, 0
      %s57 = sadd.s32 %s56, 1
      %s58 = scalar_select %p55, %s56, %s57
      %p61 = pneg %p55
      %p62 = scmp.eq.s32.totalorder %s11, 1
      %p63 = por %p61, %p62
      %p64 = scmp.ne.s32.totalorder %s56, %s59
      %p65 = scmp.eq.s32.totalorder %s11, 0
      %p66 = por %p64, %p65
      %p67 = scmp.ne.s32.totalorder %s56, %s59
      %p68 = scmp.eq.s32.totalorder %s16, 1
      %p69 = por %p67, %p68
      %p70 = scmp.ne.s32.totalorder %s59, %s60
      %p71 = scmp.eq.s32.totalorder %s16, 0
      %p72 = por %p70, %p71
      %p73 = scmp.ne.s32.totalorder %s59, %s60
      %p74 = scmp.eq.s32.totalorder %s17, 1
      %p75 = por %p73, %p74
      %p77 = scmp.ne.s32.totalorder %s60, %s76
      %p78 = scmp.eq.s32.totalorder %s17, 0
      %p79 = por %p77, %p78
      %s80 = ssub.s32 %s18, %s30
      %s81 = ssub.s32 %s19, %s26
      %s82 = sor.u32 %s80, %s81
      %p83 = scmp.eq.s32.totalorder %s82, 0
      %s85 = sadd.s32 %s84, 1
      %s86 = scalar_select %p83, %s84, %s85
      %p89 = pneg %p83
      %p90 = scmp.eq.s32.totalorder %s11, 1
      %p91 = por %p89, %p90
      %p92 = scmp.ne.s32.totalorder %s84, %s87
      %p93 = scmp.eq.s32.totalorder %s11, 0
      %p94 = por %p92, %p93
      %p95 = scmp.ne.s32.totalorder %s84, %s87
      %p96 = scmp.eq.s32.totalorder %s16, 1
      %p97 = por %p95, %p96
      %p98 = scmp.ne.s32.totalorder %s87, %s88
      %p99 = scmp.eq.s32.totalorder %s16, 0
      %p100 = por %p98, %p99
      %p101 = scmp.ne.s32.totalorder %s87, %s88
      %p102 = scmp.eq.s32.totalorder %s17, 1
      %p103 = por %p101, %p102
      %p105 = scmp.ne.s32.totalorder %s88, %s104
      %p106 = scmp.eq.s32.totalorder %s17, 0
      %p107 = por %p105, %p106
      %p108 = scmp.le.s32.totalorder 1, %s11
      %p109 = scmp.lt.s32.totalorder %s11, 3
      %p110 = pnand %p108, %p109
      %p111 = pneg %p110
      // Predicated region
      $region9: #{tpu_custom_call.1} parent=5 // pred_check
        _
      $region10: #{tpu_custom_call.1} parent=5 // pred_check_branch
        %113 = sbr.rel (%p110) target = $region12
      $region11: #{tpu_custom_call.1} parent=5 // pred_region
        %s114 = ssub.s32 %s11, 1
        // Predicated region
        $region13: #{tpu_custom_call.1} parent=11 // pred_check
          %p115 = pneg %p44
        $region14: #{tpu_custom_call.1} parent=11 // pred_check_branch
          %117 = sbr.rel (%p115) target = $region16
        $region15: #{tpu_custom_call.1} parent=11 // pred_region
          _
        $region16: #{tpu_custom_call.1} parent=11 // pred_fallthru
          _
      $region12: #{tpu_custom_call.1} parent=5 // pred_fallthru
        _
      %p118 = scmp.lt.s32.totalorder %s11, 2
      // Predicated region
      $region17: #{tpu_custom_call.1} parent=5 // pred_check
        %p119 = pneg %p118
      $region18: #{tpu_custom_call.1} parent=5 // pred_check_branch
        %121 = sbr.rel (%p119) target = $region20
      $region19: #{tpu_custom_call.1} parent=5 // pred_region
        // Predicated region
        $region21: #{tpu_custom_call.1} parent=19 // pred_check
          %p122 = pneg %p66
        $region22: #{tpu_custom_call.1} parent=19 // pred_check_branch
          %124 = sbr.rel (%p122) target = $region24
        $region23: #{tpu_custom_call.1} parent=19 // pred_region
          %s125 = smul.u32 2, %s19
          %p126 = scmp.lt.s32.totalorder %s18, 1
          %s127 = scalar_select %p126, %s18, 1
          %p128 = scmp.lt.s32.totalorder %s125, 1
          %s129 = scalar_select %p128, %s125, 1
          %s130 = smul.addr %s127, 4
          %s131 = sadd.s32 %s129, %s130
          %s132 = smul.addr %s131, 4
          %s133 = scalar_lea.vmem %s1, %s132
          %s134 = smul.u32 2, %s19
        $region24: #{tpu_custom_call.1} parent=19 // pred_fallthru
          _
      $region20: #{tpu_custom_call.1} parent=5 // pred_fallthru
        _
      %p135 = scmp.le.s32.totalorder 1, %s11
      %p136 = scmp.lt.s32.totalorder %s11, 3
      %p137 = pnand %p135, %p136
      %p138 = pneg %p137
      // Predicated region
      $region25: #{tpu_custom_call.1} parent=5 // pred_check
        _
      $region26: #{tpu_custom_call.1} parent=5 // pred_check_branch
        %140 = sbr.rel (%p137) target = $region28
      $region27: #{tpu_custom_call.1} parent=5 // pred_region
        %s141 = ssub.s32 %s11, 1
        %p142 = pneg %p44
        %p143 = pneg %p41
        %s144 = smul.u32 2, %s21
        %p145 = scmp.lt.s32.totalorder %s20, 1
        %s146 = scalar_select %p145, %s20, 1
        %p147 = scmp.lt.s32.totalorder %s144, 1
        %s148 = scalar_select %p147, %s144, 1
        %s149 = smul.addr %s146, 4
        %s150 = sadd.s32 %s148, %s149
        %s151 = smul.addr %s150, 4
        %s152 = scalar_lea.vmem %s1, %s151
        %p153 = pneg %p72
        %p154 = pneg %p69
        %p155 = pneg %p100
        %p156 = pneg %p97
        %s157 = sand.u32 %s87, 1
        %s158 = scalar_lea.sflag [#allocation3], %s157
        %s159 = sand.u32 %s87, 1
        %s160 = smul.addr %s159, 80
        %s161 = scalar_lea.vmem [#allocation2], %s160
        %s162 = smul.u32 2, %s21
        %p163 = scmp.lt.s32.totalorder %s20, 1
        %s164 = scalar_select %p163, %s20, 1
        %p165 = scmp.lt.s32.totalorder %s162, 1
        %s166 = scalar_select %p165, %s162, 1
        %s167 = smul.addr %s164, 4
        %s168 = sadd.s32 %s166, %s167
        %s169 = smul.addr %s168, 4
        %s170 = scalar_lea.vmem %s1, %s169
        %s171 = smul.u32 2, %s21
        %s172 = smul.u32 2, %s21
        %v174 = vld [vmem:[%s0] sm:$0xf]
        %v175 = vld [vmem:[%s0 + $0x4] sm:$0xf]
        %v176 = vld [vmem:[%s0 + $0x8] sm:$0xf]
        %v177 = vld [vmem:[%s0 + $0xc] sm:$0xf]
        %v178 = vld [vmem:[%s0 + $0x10] sm:$0xf]
        %v179 = vld [vmem:[%s0 + $0x14] sm:$0xf]
        %v180 = vld [vmem:[%s0 + $0x18] sm:$0xf]
        %v181 = vld [vmem:[%s0 + $0x1c] sm:$0xf]
        %v182 = vld [vmem:[%s0 + $0x20] sm:$0xf]
        %v183 = vld [vmem:[%s0 + $0x24] sm:$0xf]
        %v184 = vld [vmem:[%s170] sm:$0xff]
        %v185 = vld [vmem:[%s170 + $0x8] sm:$0xff]
        %v196 = vunpack.c.l.b16 %v174
        %v197 = vunpack.c.l.b16 %v175
        %v198 = vunpack.c.l.b16 %v176
        %v199 = vunpack.c.l.b16 %v177
        %v200 = vunpack.c.l.b16 %v178
        %v201 = vunpack.c.l.b16 %v179
        %v202 = vunpack.c.l.b16 %v180
        %v203 = vunpack.c.l.b16 %v181
        %v204 = vunpack.c.l.b16 %v182
        %v205 = vunpack.c.l.b16 %v183
        %v206 = vpack.c.b16 %v197, %v196
        %v207 = vpack.c.b16 %v199, %v198
        %v208 = vpack.c.b16 %v201, %v200
        %v209 = vpack.c.b16 %v203, %v202
        %v210 = vpack.c.b16 %v205, %v204
        %v213 = vunpack.c.l.b16 %v184
        %v214 = vunpack.c.h.b16 %v184
        %v215 = vunpack.c.l.b16 %v185
        %v216 = vunpack.c.h.b16 %v185
        %v217 = vpack.c.b16 %v215, %v213
        %v218 = vpack.c.b16 %v216, %v214
        %vm221 = vcmask 130048
        %v223 = vsel %vm221, %v206, 0
        %v226 = vsel %vm221, %v207, 0
        %v229 = vsel %vm221, %v208, 0
        %v232 = vsel %vm221, %v209, 0
        %v235 = vsel %vm221, %v210, 0
        %237 = vmatprep.subr.bf16.mxu0 0
        %238 = vmatpush1.bf16.msra.mxu0 0
        %239 = vmatprep.subr.bf16.mxu0 0
        %240 = vmatpush1.bf16.msra.mxu0 0
        %241 = vmatprep.subr.bf16.mxu0 0
        %242 = vmatpush1.bf16.msra.mxu0 0
        %243 = vmatprep.subr.bf16.mxu0 0
        %244 = vmatpush1.bf16.msra.mxu0 0
        %245 = vmatprep.subr.bf16.mxu0 0
        %246 = vmatpush1.bf16.msra.mxu0 0
        %247 = vmatprep.subr.bf16.mxu0 0
        %248 = vmatpush1.bf16.msra.mxu0 0
        %249 = vmatprep.subr.bf16.mxu0 0
        %250 = vmatpush1.bf16.msra.mxu0 0
        %251 = vmatprep.subr.bf16.mxu0 %v218
        %252 = vmatpush1.bf16.msra.mxu0 %v217
        %253 = vmatprep.subr.bf16.mxu0 0
        %254 = vmatpush2.bf16.msra.mxu0 0
        %255 = vmatprep.subr.bf16.mxu0 0
        %256 = vmatpush2.bf16.msra.mxu0 0
        %257 = vmatprep.subr.bf16.mxu0 0
        %258 = vmatpush2.bf16.msra.mxu0 0
        %259 = vmatprep.subr.bf16.mxu0 0
        %260 = vmatpush2.bf16.msra.mxu0 0
        %261 = vmatprep.subr.bf16.mxu0 0
        %262 = vmatpush2.bf16.msra.mxu0 0
        %263 = vmatprep.subr.bf16.mxu0 0
        %264 = vmatpush2.bf16.msra.mxu0 0
        %265 = vmatprep.subr.bf16.mxu0 0
        %266 = vmatpush2.bf16.msra.mxu0 0
        %267 = vmatprep.subr.bf16.mxu0 0
        %268 = vmatpush2.bf16.msra.mxu0 0
        %269 = vmatprep.mubr.bf16.mxu0 0
        %270 = vmatmul.mubr.bf16.gmra.mxu0 %v223
        %v271 = vpop.f32.mrf.mxu0
        %v272 = vadd.f32 0.0, %v271
        %v273 = vpop.f32.mrf.mxu0
        %v274 = vadd.f32 0.0, %v273
        %v275 = vpop.f32.mrf.mxu0
        %v276 = vadd.f32 0.0, %v275
        %v277 = vpop.f32.mrf.mxu0
        %v278 = vadd.f32 0.0, %v277
        %279 = vmatprep.mubr.bf16.mxu0 0
        %280 = vmatmul.mubr.bf16.gmra.mxu0 %v226
        %v281 = vpop.f32.mrf.mxu0
        %v282 = vadd.f32 0.0, %v281
        %v283 = vpop.f32.mrf.mxu0
        %v284 = vadd.f32 0.0, %v283
        %v285 = vpop.f32.mrf.mxu0
        %v286 = vadd.f32 0.0, %v285
        %v287 = vpop.f32.mrf.mxu0
        %v288 = vadd.f32 0.0, %v287
        %289 = vmatprep.mubr.bf16.mxu0 0
        %290 = vmatmul.mubr.bf16.gmra.mxu0 %v229
        %v291 = vpop.f32.mrf.mxu0
        %v292 = vadd.f32 0.0, %v291
        %v293 = vpop.f32.mrf.mxu0
        %v294 = vadd.f32 0.0, %v293
        %v295 = vpop.f32.mrf.mxu0
        %v296 = vadd.f32 0.0, %v295
        %v297 = vpop.f32.mrf.mxu0
        %v298 = vadd.f32 0.0, %v297
        %299 = vmatprep.mubr.bf16.mxu0 0
        %300 = vmatmul.mubr.bf16.gmra.mxu0 %v232
        %v301 = vpop.f32.mrf.mxu0
        %v302 = vadd.f32 0.0, %v301
        %v303 = vpop.f32.mrf.mxu0
        %v304 = vadd.f32 0.0, %v303
        %v305 = vpop.f32.mrf.mxu0
        %v306 = vadd.f32 0.0, %v305
        %v307 = vpop.f32.mrf.mxu0
        %v308 = vadd.f32 0.0, %v307
        %309 = vmatprep.mubr.bf16.mxu0 0
        %310 = vmatmul.mubr.bf16.gmra.mxu0 %v235
        %v311 = vpop.f32.mrf.mxu0
        %v312 = vadd.f32 0.0, %v311
        %v313 = vpop.f32.mrf.mxu0
        %v314 = vadd.f32 0.0, %v313
        %v315 = vpop.f32.mrf.mxu0
        %v316 = vadd.f32 0.0, %v315
        %v317 = vpop.f32.mrf.mxu0
        %v318 = vadd.f32 0.0, %v317
        %319 = vdwg.mxu0
        %v320 = vpack.c.bf16 %v276, %v272
        %v321 = vpack.c.bf16 %v278, %v274
        %v322 = vpack.c.bf16 %v286, %v282
        %v323 = vpack.c.bf16 %v288, %v284
        %v324 = vpack.c.bf16 %v296, %v292
        %v325 = vpack.c.bf16 %v298, %v294
        %v326 = vpack.c.bf16 %v306, %v302
        %v327 = vpack.c.bf16 %v308, %v304
        %v328 = vpack.c.bf16 %v316, %v312
        %v329 = vpack.c.bf16 %v318, %v314
        %v340 = vunpack.c.l.b16 %v320
        %v341 = vunpack.c.l.b16 %v321
        %v342 = vunpack.c.h.b16 %v320
        %v343 = vunpack.c.h.b16 %v321
        %v344 = vunpack.c.l.b16 %v322
        %v345 = vunpack.c.l.b16 %v323
        %v346 = vunpack.c.h.b16 %v322
        %v347 = vunpack.c.h.b16 %v323
        %v348 = vunpack.c.l.b16 %v324
        %v349 = vunpack.c.l.b16 %v325
        %v350 = vunpack.c.h.b16 %v324
        %v351 = vunpack.c.h.b16 %v325
        %v352 = vunpack.c.l.b16 %v326
        %v353 = vunpack.c.l.b16 %v327
        %v354 = vunpack.c.h.b16 %v326
        %v355 = vunpack.c.h.b16 %v327
        %v356 = vunpack.c.l.b16 %v328
        %v357 = vunpack.c.l.b16 %v329
        %v358 = vunpack.c.h.b16 %v328
        %v359 = vunpack.c.h.b16 %v329
        %v360 = vpack.c.b16 %v341, %v340
        %v361 = vpack.c.b16 %v343, %v342
        %v362 = vpack.c.b16 %v345, %v344
        %v363 = vpack.c.b16 %v347, %v346
        %v364 = vpack.c.b16 %v349, %v348
        %v365 = vpack.c.b16 %v351, %v350
        %v366 = vpack.c.b16 %v353, %v352
        %v367 = vpack.c.b16 %v355, %v354
        %v368 = vpack.c.b16 %v357, %v356
        %v369 = vpack.c.b16 %v359, %v358
        %380 = vst [vmem:[%s161] sm:$0xff] %v360
        %381 = vst [vmem:[%s161 + $0x8] sm:$0xff] %v361
        %382 = vst [vmem:[%s161 + $0x10] sm:$0xff] %v362
        %383 = vst [vmem:[%s161 + $0x18] sm:$0xff] %v363
        %384 = vst [vmem:[%s161 + $0x20] sm:$0xff] %v364
        %385 = vst [vmem:[%s161 + $0x28] sm:$0xff] %v365
        %386 = vst [vmem:[%s161 + $0x30] sm:$0xff] %v366
        %387 = vst [vmem:[%s161 + $0x38] sm:$0xff] %v367
        %388 = vst [vmem:[%s161 + $0x40] sm:$0xff] %v368
        %389 = vst [vmem:[%s161 + $0x48] sm:$0xff] %v369
        %s390 = sand.u32 %s87, 1
        %s391 = scalar_lea.sflag [#allocation3], %s390
        %s392 = sand.u32 %s87, 1
        %s393 = smul.addr %s392, 80
        %s394 = scalar_lea.vmem [#allocation2], %s393
        // Predicated region
        $region29: #{tpu_custom_call.1} parent=27 // pred_check
          %p395 = pneg %p97
        $region30: #{tpu_custom_call.1} parent=27 // pred_check_branch
          %397 = sbr.rel (%p395) target = $region32
        $region31: #{tpu_custom_call.1} parent=27 // pred_region
          %s398 = smul.u32 2, %s21
          %s400 = ssub.s32 1280, 1280
          %401 = vsyncadd %s391, %s400
          %s402 = smul.addr %s20, 20
          %s403 = sadd.s32 %s398, %s402
          %s404 = smul.addr %s403, 64
          %s405 = scalar_lea.hbm %s2, %s404
          %s406 = sshll.u32 %s394, 4
          %s407 = int_to_ptr.vmem [resolvable:$true] %s406
          %412 = dma.vmem_to_hbm [thread:$0]  %s407, 1280, %s405, %s391, 128, 128, 8
        $region32: #{tpu_custom_call.1} parent=27 // pred_fallthru
          _
      $region28: #{tpu_custom_call.1} parent=5 // pred_fallthru
        _
      %p413 = scmp.le.s32.totalorder 2, %s11
      // Predicated region
      $region33: #{tpu_custom_call.1} parent=5 // pred_check
        %p414 = pneg %p413
      $region34: #{tpu_custom_call.1} parent=5 // pred_check_branch
        %416 = sbr.rel (%p414) target = $region36
      $region35: #{tpu_custom_call.1} parent=5 // pred_region
        %s417 = ssub.s32 %s11, 2
        // Predicated region
        $region37: #{tpu_custom_call.1} parent=35 // pred_check
          %p418 = pneg %p103
        $region38: #{tpu_custom_call.1} parent=35 // pred_check_branch
          %420 = sbr.rel (%p418) target = $region40
        $region39: #{tpu_custom_call.1} parent=35 // pred_region
          %s421 = sand.u32 %s88, 1
          %s422 = scalar_lea.sflag [#allocation3], %s421
          %s423 = sand.u32 %s88, 1
          %s424 = smul.addr %s423, 80
          %s425 = scalar_lea.vmem [#allocation2], %s424
          %426 = dma.done %s422, 1280
        $region40: #{tpu_custom_call.1} parent=35 // pred_fallthru
          _
      $region36: #{tpu_custom_call.1} parent=5 // pred_fallthru
        _
    $region6: #{tpu_custom_call.1} parent=1 // loop_footer
      %s15 = sadd.s32 1, %s11
    $region7: #{tpu_custom_call.1} parent=1 // loop_footer_branch
      %10 = sbr.rel target = $region3
    $region8: #{tpu_custom_call.1} parent=1 // loop_exit
      _
    %427 = vsyncpa [#allocation3], 1
    %s428 = scalar_lea.sflag [#allocation3], 1
    %429 = vsyncpa %s428, 1

</llo_original>
